<compile_context>
chip_gen: v7x
topology: tpu7x:2x2x1
jax: 0.10.0
libtpu: 0.0.40
codegen_flags: <defaults>
</compile_context>

<pallas_src>
import functools

import jax
import jax.numpy as jnp
from jax.experimental import pallas as pl
from jax.experimental.pallas import tpu as pltpu

LANE = 128
SUBLANE = 8


def _round_up(x, m):
    return (x + m - 1) // m * m


def _fused_mlp_kernel(x_ref, w_ref, b_ref, o_ref, h_a, h_b, *, n_layers: int):
    """Fused MLP forward on one batch tile.

    x_ref: [Bt, P] bf16      w_ref: [L, P, P] bf16      b_ref: [L, 1, P] f32
    o_ref: [Bt, P] f32       h_a/h_b: [Bt, P] f32 VMEM scratch (ping-pong activations)
    """
    bufs = (h_a, h_b)
    for i in range(n_layers):  # static Python loop: n_layers is small & compile-time
        if i == 0:
            src = x_ref[...].astype(jnp.bfloat16)
        else:
            src = bufs[i % 2][...].astype(jnp.bfloat16)
        # MXU matmul in bf16, f32 accumulation.
        y = jnp.dot(src, w_ref[i], preferred_element_type=jnp.float32)
        y = y + b_ref[i]  # [1, P] broadcast, f32 epilogue
        if i < n_layers - 1:
            bufs[(i + 1) % 2][...] = jnp.maximum(y, 0.0)
        else:
            o_ref[...] = y.astype(o_ref.dtype)


def mlp_forward(params, x):
    """Forward pass of MLPNet: (Linear, ReLU) * (n_layers - 1), then final Linear."""
    B, Din = x.shape
    L = len(params)
    dims = [Din] + [w.shape[1] for w, _ in params]
    Dout = dims[-1]

    # Uniform padded feature width (lane-dense, multiple of 128).
    P = max(_round_up(d, LANE) for d in dims)

    # Zero-pad & stack weights (bf16) and biases (f32). Zero padding keeps math exact:
    # padded input columns hit zero weight rows, padded output columns get zero bias.
    w_stack = jnp.zeros((L, P, P), jnp.bfloat16)
    b_stack = jnp.zeros((L, 1, P), jnp.float32)
    for i, (w, b) in enumerate(params):
        din_i, dout_i = w.shape
        w_stack = w_stack.at[i, :din_i, :dout_i].set(w.astype(jnp.bfloat16))
        b_stack = b_stack.at[i, 0, :dout_i].set(b.astype(jnp.float32))

    # Pad batch; tile it (one tile here at small sizes, parallel grid when it grows).
    Bp = _round_up(B, SUBLANE)
    b_tile = Bp if Bp <= 128 else 128
    Bp = _round_up(Bp, b_tile)
    x_pad = jnp.zeros((Bp, P), jnp.bfloat16)
    x_pad = x_pad.at[:B, :Din].set(x.astype(jnp.bfloat16))

    flops = 2 * Bp * P * P * L
    bytes_accessed = (x_pad.size * 2 + w_stack.size * 2 + b_stack.size * 4 + Bp * P * 4)

    out_padded = pl.pallas_call(
        functools.partial(_fused_mlp_kernel, n_layers=L),
        out_shape=jax.ShapeDtypeStruct((Bp, P), jnp.float32),
        grid_spec=pltpu.PrefetchScalarGridSpec(
            num_scalar_prefetch=0,
            grid=(Bp // b_tile,),
            in_specs=[
                pl.BlockSpec((b_tile, P), lambda i: (i, 0)),      # x tile
                pl.BlockSpec((L, P, P), lambda i: (0, 0, 0)),     # stacked weights
                pl.BlockSpec((L, 1, P), lambda i: (0, 0, 0)),     # stacked biases
            ],
            out_specs=pl.BlockSpec((b_tile, P), lambda i: (i, 0)),
            scratch_shapes=[
                pltpu.VMEM((b_tile, P), jnp.float32),  # activation ping
                pltpu.VMEM((b_tile, P), jnp.float32),  # activation pong
            ],
        ),
        compiler_params=pltpu.CompilerParams(
            dimension_semantics=("parallel",),
        ),
        cost_estimate=pl.CostEstimate(
            flops=flops, transcendentals=0, bytes_accessed=bytes_accessed),
    )(x_pad, w_stack, b_stack)

    return out_padded[:B, :Dout]


def init_mlp_params(key, in_features, out_features, n_layers, n_hidden):
    """Deterministic init mirroring nn.Linear's default U(-1/sqrt(fan_in), 1/sqrt(fan_in)).

    Returns a list of (W[in, out], b[out]) per layer (W already transposed for the kernel).
    """
    dims = [in_features] + [n_hidden] * (n_layers - 1) + [out_features]
    params = []
    for fan_in, fan_out in zip(dims[:-1], dims[1:]):
        key, kw, kb = jax.random.split(key, 3)
        bound = 1.0 / jnp.sqrt(jnp.float32(fan_in))
        w = jax.random.uniform(kw, (fan_in, fan_out), jnp.float32, -bound, bound)
        b = jax.random.uniform(kb, (fan_out,), jnp.float32, -bound, bound)
        params.append((w, b))
    return params


if __name__ == "__main__":
    # Small shapes consistent with the module's [batch, in_features] contract.
    batch = 8
    in_features = 32
    out_features = 8
    n_layers = 3
    n_hidden = 32

    key = jax.random.PRNGKey(0)
    key, kx = jax.random.split(key)
    x = jax.random.normal(kx, (batch, in_features), jnp.float32)

    params = init_mlp_params(key, in_features, out_features, n_layers, n_hidden)

    y = mlp_forward(params, x)
    y = jax.block_until_ready(y)

    # Pure-JAX reference following the same bf16-operand / f32-accumulate path.
    ref = x
    for i, (w, b) in enumerate(params):
        ref = jnp.dot(ref.astype(jnp.bfloat16), w.astype(jnp.bfloat16),
                      preferred_element_type=jnp.float32) + b
        if i != len(params) - 1:
            ref = jnp.maximum(ref, 0.0)

    assert y.shape == (batch, out_features)
    assert jnp.allclose(y, ref, atol=2e-3, rtol=2e-3)

    print("KERNEL_OK")
</pallas_src>

<mosaic_0001>
module attributes {stable_mosaic.version = 11 : i64} {
  func.func @_fused_mlp_kernel(%arg0: i32, %arg1: memref<8x128xbf16, #tpu.memory_space<vmem>>, %arg2: memref<3x128x128xbf16, #tpu.memory_space<vmem>>, %arg3: memref<3x1x128xf32, #tpu.memory_space<vmem>>, %arg4: memref<8x128xf32, #tpu.memory_space<vmem>>, %arg5: memref<8x128xf32, #tpu.memory_space<vmem>>, %arg6: memref<8x128xf32, #tpu.memory_space<vmem>>) attributes {dimension_semantics = [#tpu.dimension_semantics<parallel>], iteration_bounds = array<i64: 1>, scalar_prefetch = 0 : i64, scratch_operands = 2 : i64, tpu.core_type = #tpu.core_type<tc>, window_params = [{transform_indices = @transform_0, window_bounds = array<i64: 8, 128>}, {pipeline_mode = #tpu.pipeline_mode<synchronous>, transform_indices = @transform_1, window_bounds = array<i64: 3, 128, 128>}, {pipeline_mode = #tpu.pipeline_mode<synchronous>, transform_indices = @transform_2, window_bounds = array<i64: 3, 1, 128>}, {transform_indices = @transform_3, window_bounds = array<i64: 8, 128>}]} {
    %c0 = arith.constant 0 : index
    %c0_0 = arith.constant 0 : index
    %0 = vector.load %arg1[%c0, %c0_0] : memref<8x128xbf16, #tpu.memory_space<vmem>>, vector<8x128xbf16>
    %c0_1 = arith.constant 0 : index
    %c0_2 = arith.constant 0 : index
    %c0_3 = arith.constant 0 : index
    %1 = vector.load %arg2[%c0_1, %c0_2, %c0_3] : memref<3x128x128xbf16, #tpu.memory_space<vmem>>, vector<1x128x128xbf16>
    %2 = vector.shape_cast %1 : vector<1x128x128xbf16> to vector<128x128xbf16>
    %cst = arith.constant dense<0.000000e+00> : vector<8x128xf32>
    %3 = tpu.matmul %0, %2, %cst {dimension_numbers = #tpu.dot_dimension_numbers<[1], [0], [0], [1], [0, 0, 1, 1], [], []>} : vector<8x128xbf16>, vector<128x128xbf16>, vector<8x128xf32> -> vector<8x128xf32>
    %c0_4 = arith.constant 0 : index
    %c0_5 = arith.constant 0 : index
    %c0_6 = arith.constant 0 : index
    %4 = vector.load %arg3[%c0_4, %c0_5, %c0_6] : memref<3x1x128xf32, #tpu.memory_space<vmem>>, vector<1x1x128xf32>
    %5 = vector.shape_cast %4 : vector<1x1x128xf32> to vector<1x128xf32>
    %6 = vector.broadcast %5 : vector<1x128xf32> to vector<8x128xf32>
    %7 = arith.addf %3, %6 : vector<8x128xf32>
    %cst_7 = arith.constant 0.000000e+00 : f32
    %8 = vector.broadcast %cst_7 : f32 to vector<8x128xf32>
    %9 = arith.maximumf %7, %8 : vector<8x128xf32>
    %c0_8 = arith.constant 0 : index
    %c0_9 = arith.constant 0 : index
    %10 = vector.load %arg6[%c0_8, %c0_9] : memref<8x128xf32, #tpu.memory_space<vmem>>, vector<8x128xf32>
    tpu.vector_store %arg6[%c0_8, %c0_9], %9 {strides = array<i32>} : memref<8x128xf32, #tpu.memory_space<vmem>>, vector<8x128xf32>,
    %c0_10 = arith.constant 0 : index
    %c0_11 = arith.constant 0 : index
    %11 = vector.load %arg6[%c0_10, %c0_11] : memref<8x128xf32, #tpu.memory_space<vmem>>, vector<8x128xf32>
    %12 = arith.truncf %11 : vector<8x128xf32> to vector<8x128xbf16>
    %c1 = arith.constant 1 : index
    %c0_12 = arith.constant 0 : index
    %c0_13 = arith.constant 0 : index
    %13 = vector.load %arg2[%c1, %c0_12, %c0_13] : memref<3x128x128xbf16, #tpu.memory_space<vmem>>, vector<1x128x128xbf16>
    %14 = vector.shape_cast %13 : vector<1x128x128xbf16> to vector<128x128xbf16>
    %cst_14 = arith.constant dense<0.000000e+00> : vector<8x128xf32>
    %15 = tpu.matmul %12, %14, %cst_14 {dimension_numbers = #tpu.dot_dimension_numbers<[1], [0], [0], [1], [0, 0, 1, 1], [], []>} : vector<8x128xbf16>, vector<128x128xbf16>, vector<8x128xf32> -> vector<8x128xf32>
    %c1_15 = arith.constant 1 : index
    %c0_16 = arith.constant 0 : index
    %c0_17 = arith.constant 0 : index
    %16 = vector.load %arg3[%c1_15, %c0_16, %c0_17] : memref<3x1x128xf32, #tpu.memory_space<vmem>>, vector<1x1x128xf32>
    %17 = vector.shape_cast %16 : vector<1x1x128xf32> to vector<1x128xf32>
    %18 = vector.broadcast %17 : vector<1x128xf32> to vector<8x128xf32>
    %19 = arith.addf %15, %18 : vector<8x128xf32>
    %cst_18 = arith.constant 0.000000e+00 : f32
    %20 = vector.broadcast %cst_18 : f32 to vector<8x128xf32>
    %21 = arith.maximumf %19, %20 : vector<8x128xf32>
    %c0_19 = arith.constant 0 : index
    %c0_20 = arith.constant 0 : index
    %22 = vector.load %arg5[%c0_19, %c0_20] : memref<8x128xf32, #tpu.memory_space<vmem>>, vector<8x128xf32>
    tpu.vector_store %arg5[%c0_19, %c0_20], %21 {strides = array<i32>} : memref<8x128xf32, #tpu.memory_space<vmem>>, vector<8x128xf32>,
    %c0_21 = arith.constant 0 : index
    %c0_22 = arith.constant 0 : index
    %23 = vector.load %arg5[%c0_21, %c0_22] : memref<8x128xf32, #tpu.memory_space<vmem>>, vector<8x128xf32>
    %24 = arith.truncf %23 : vector<8x128xf32> to vector<8x128xbf16>
    %c2 = arith.constant 2 : index
    %c0_23 = arith.constant 0 : index
    %c0_24 = arith.constant 0 : index
    %25 = vector.load %arg2[%c2, %c0_23, %c0_24] : memref<3x128x128xbf16, #tpu.memory_space<vmem>>, vector<1x128x128xbf16>
    %26 = vector.shape_cast %25 : vector<1x128x128xbf16> to vector<128x128xbf16>
    %cst_25 = arith.constant dense<0.000000e+00> : vector<8x128xf32>
    %27 = tpu.matmul %24, %26, %cst_25 {dimension_numbers = #tpu.dot_dimension_numbers<[1], [0], [0], [1], [0, 0, 1, 1], [], []>} : vector<8x128xbf16>, vector<128x128xbf16>, vector<8x128xf32> -> vector<8x128xf32>
    %c2_26 = arith.constant 2 : index
    %c0_27 = arith.constant 0 : index
    %c0_28 = arith.constant 0 : index
    %28 = vector.load %arg3[%c2_26, %c0_27, %c0_28] : memref<3x1x128xf32, #tpu.memory_space<vmem>>, vector<1x1x128xf32>
    %29 = vector.shape_cast %28 : vector<1x1x128xf32> to vector<1x128xf32>
    %30 = vector.broadcast %29 : vector<1x128xf32> to vector<8x128xf32>
    %31 = arith.addf %27, %30 : vector<8x128xf32>
    %c0_29 = arith.constant 0 : index
    %c0_30 = arith.constant 0 : index
    %32 = vector.load %arg4[%c0_29, %c0_30] : memref<8x128xf32, #tpu.memory_space<vmem>>, vector<8x128xf32>
    tpu.vector_store %arg4[%c0_29, %c0_30], %31 {strides = array<i32>} : memref<8x128xf32, #tpu.memory_space<vmem>>, vector<8x128xf32>,
    return
  }
  func.func @transform_0(%arg0: i32) -> (i32, i32) {
    %c0_i32 = arith.constant 0 : i32
    %c0_i32_0 = arith.constant 0 : i32
    return %arg0, %c0_i32 : i32, i32
  }
  func.func @transform_1(%arg0: i32) -> (i32, i32, i32) {
    %c0_i32 = arith.constant 0 : i32
    %c0_i32_0 = arith.constant 0 : i32
    %c0_i32_1 = arith.constant 0 : i32
    %c0_i32_2 = arith.constant 0 : i32
    return %c0_i32, %c0_i32_0, %c0_i32_1 : i32, i32, i32
  }
  func.func @transform_2(%arg0: i32) -> (i32, i32, i32) {
    %c0_i32 = arith.constant 0 : i32
    %c0_i32_0 = arith.constant 0 : i32
    %c0_i32_1 = arith.constant 0 : i32
    %c0_i32_2 = arith.constant 0 : i32
    return %c0_i32, %c0_i32_0, %c0_i32_1 : i32, i32, i32
  }
  func.func @transform_3(%arg0: i32) -> (i32, i32) {
    %c0_i32 = arith.constant 0 : i32
    %c0_i32_0 = arith.constant 0 : i32
    return %arg0, %c0_i32 : i32, i32
  }
}

</mosaic_0001>

<llo_original>
// kernel: tpu_custom_call.1
$region0: #{tpu_custom_call.1}
  #allocation0 [shape = 'u32[]', space=smem, size = 0x4, offset = 0x4, fixed_abs, tag = 'smem constant byte address 0x4 - core index']
  #allocation1 [shape = 'u32[144,128]{1,0:T(1,128)}', space=vmem, size = 0x12000, scoped, tag = 'internal scratch']
  #allocation2 [shape = 'f32[8,128]{1,0:T(8,128)}', space=vmem, size = 0x1000, scoped, tag = 'scratch operand']
  #allocation3 [shape = 'f32[8,128]{1,0:T(8,128)}', space=vmem, size = 0x1000, scoped, tag = 'scratch operand']
  %s0 = inlined_call_operand.hbm [shape: bf16[8,128], index: 0, kind: input, shape index: {}]
  %s1 = inlined_call_operand.hbm [shape: bf16[3,128,128], index: 1, kind: input, shape index: {}]
  %s2 = inlined_call_operand.vmem [shape: f32[3,1,128], index: 2, kind: input, shape index: {}]
  %s3 = inlined_call_operand.hbm [shape: f32[8,128], index: 3, kind: output, shape index: {}]
  %s4 = sld [smem:[#allocation0]]
  $region30: #{tpu_custom_call.1} parent=0
    _
  %s6 = ssub.s32 1, %s4
  %s7 = scalar_select 0, %s6, %s4
  $region1: #{tpu_custom_call.1} parent=0
    #allocation4 [shape = 'u8[2048]{0}', space=vmem, size = 0x800, scoped, tag = 'input window, operand 0, single buffered']
    #allocation5 [shape = 's32[1]{0}', space=sflag, size = 0x4, scoped, tag = 'scoped memory for tpu_custom_call.1']
    #allocation6 [shape = 's32[1]{0}', space=sflag, size = 0x4, scoped, tag = 'scoped memory for tpu_custom_call.1']
    #allocation7 [shape = 'u8[98304]{0}', space=vmem, size = 0x18000, scoped, tag = 'input window, operand 1, single buffered']
    #allocation8 [shape = 's32[1]{0}', space=sflag, size = 0x4, scoped, tag = 'scoped memory for tpu_custom_call.1']
    #allocation9 [shape = 'u8[4096]{0}', space=vmem, size = 0x1000, scoped, tag = 'output window, operand 0, single buffered']
    %8 = vsyncpa [#allocation5], 0
    %9 = vsyncpa [#allocation8], 0
    %10 = vsyncpa [#allocation6], 0
    // Predicated region
    $region2: #{tpu_custom_call.1} parent=1 // pred_check
      _
    $region3: #{tpu_custom_call.1} parent=1 // pred_check_branch
      %12 = sbr.rel (0) target = $region5
    $region4: #{tpu_custom_call.1} parent=1 // pred_region
      %s14 = ssub.s32 64, 64
      %15 = vsyncadd [#allocation5], %s14
      %s17 = sshll.u32 [#allocation4], 4
      %s18 = int_to_ptr.vmem [resolvable:$true] %s17
      %20 = dma.hbm_to_vmem [thread:$0]  %s0, 64, %s18, [#allocation5]
    $region5: #{tpu_custom_call.1} parent=1 // pred_fallthru
      _
    // Predicated region
    $region6: #{tpu_custom_call.1} parent=1 // pred_check
      _
    $region7: #{tpu_custom_call.1} parent=1 // pred_check_branch
      %22 = sbr.rel (0) target = $region9
    $region8: #{tpu_custom_call.1} parent=1 // pred_region
      %s24 = ssub.s32 3072, 3072
      %25 = vsyncadd [#allocation8], %s24
      %s26 = sshll.u32 [#allocation7], 4
      %s27 = int_to_ptr.vmem [resolvable:$true] %s26
      %32 = dma.hbm_to_vmem [thread:$0]  %s1, 3072, %s27, [#allocation8], 64, 64, 4
    $region9: #{tpu_custom_call.1} parent=1 // pred_fallthru
      _
    // Predicated region
    $region10: #{tpu_custom_call.1} parent=1 // pred_check
      _
    $region11: #{tpu_custom_call.1} parent=1 // pred_check_branch
      %34 = sbr.rel (0) target = $region13
    $region12: #{tpu_custom_call.1} parent=1 // pred_region
      _
    $region13: #{tpu_custom_call.1} parent=1 // pred_fallthru
      _
    // Predicated region
    $region14: #{tpu_custom_call.1} parent=1 // pred_check
      _
    $region15: #{tpu_custom_call.1} parent=1 // pred_check_branch
      %36 = sbr.rel (0) target = $region17
    $region16: #{tpu_custom_call.1} parent=1 // pred_region
      %37 = dma.done [#allocation5], 64
    $region17: #{tpu_custom_call.1} parent=1 // pred_fallthru
      _
    // Predicated region
    $region18: #{tpu_custom_call.1} parent=1 // pred_check
      _
    $region19: #{tpu_custom_call.1} parent=1 // pred_check_branch
      %39 = sbr.rel (0) target = $region21
    $region20: #{tpu_custom_call.1} parent=1 // pred_region
      %40 = dma.done [#allocation8], 3072
    $region21: #{tpu_custom_call.1} parent=1 // pred_fallthru
      _
    %v42 = vld [vmem:[#allocation4] sm:$0xf]
    %v43 = vld [vmem:[#allocation7] sm:$0xf]
    %v44 = vld [vmem:[#allocation7 + $0x4] sm:$0xf]
    %v45 = vld [vmem:[#allocation7 + $0x8] sm:$0xf]
    %v46 = vld [vmem:[#allocation7 + $0xc] sm:$0xf]
    %v47 = vld [vmem:[#allocation7 + $0x10] sm:$0xf]
    %v48 = vld [vmem:[#allocation7 + $0x14] sm:$0xf]
    %v49 = vld [vmem:[#allocation7 + $0x18] sm:$0xf]
    %v50 = vld [vmem:[#allocation7 + $0x1c] sm:$0xf]
    %v51 = vld [vmem:[#allocation7 + $0x20] sm:$0xf]
    %v52 = vld [vmem:[#allocation7 + $0x24] sm:$0xf]
    %v53 = vld [vmem:[#allocation7 + $0x28] sm:$0xf]
    %v54 = vld [vmem:[#allocation7 + $0x2c] sm:$0xf]
    %v55 = vld [vmem:[#allocation7 + $0x30] sm:$0xf]
    %v56 = vld [vmem:[#allocation7 + $0x34] sm:$0xf]
    %v57 = vld [vmem:[#allocation7 + $0x38] sm:$0xf]
    %v58 = vld [vmem:[#allocation7 + $0x3c] sm:$0xf]
    %v59 = vld [vmem:[%s2] sm:$0x1]
    %v61 = vlaneseq
    %v62 = vshrl.u32 %v61, 7
    %v63 = vsub.s32 0, %v62
    %v64 = vrot.slane %v59, %v63
    %v82 = vunpack.c.l.b16 %v43
    %v83 = vunpack.c.l.b16 %v44
    %v84 = vunpack.c.l.b16 %v45
    %v85 = vunpack.c.l.b16 %v46
    %v86 = vunpack.c.l.b16 %v47
    %v87 = vunpack.c.l.b16 %v48
    %v88 = vunpack.c.l.b16 %v49
    %v89 = vunpack.c.l.b16 %v50
    %v90 = vunpack.c.l.b16 %v51
    %v91 = vunpack.c.l.b16 %v52
    %v92 = vunpack.c.l.b16 %v53
    %v93 = vunpack.c.l.b16 %v54
    %v94 = vunpack.c.l.b16 %v55
    %v95 = vunpack.c.l.b16 %v56
    %v96 = vunpack.c.l.b16 %v57
    %v97 = vunpack.c.l.b16 %v58
    %v98 = vpack.c.b16 %v83, %v82
    %v99 = vpack.c.b16 %v85, %v84
    %v100 = vpack.c.b16 %v87, %v86
    %v101 = vpack.c.b16 %v89, %v88
    %v102 = vpack.c.b16 %v91, %v90
    %v103 = vpack.c.b16 %v93, %v92
    %v104 = vpack.c.b16 %v95, %v94
    %v105 = vpack.c.b16 %v97, %v96
    %114 = vmatprep.subr.bf16.mxu0 0
    %115 = vmatpush1.bf16.msra.mxu0 %v98
    %116 = vmatprep.subr.bf16.mxu0 0
    %117 = vmatpush1.bf16.msra.mxu0 %v99
    %118 = vmatprep.subr.bf16.mxu0 0
    %119 = vmatpush1.bf16.msra.mxu0 %v100
    %120 = vmatprep.subr.bf16.mxu0 0
    %121 = vmatpush1.bf16.msra.mxu0 %v101
    %122 = vmatprep.subr.bf16.mxu0 0
    %123 = vmatpush1.bf16.msra.mxu0 %v102
    %124 = vmatprep.subr.bf16.mxu0 0
    %125 = vmatpush1.bf16.msra.mxu0 %v103
    %126 = vmatprep.subr.bf16.mxu0 0
    %127 = vmatpush1.bf16.msra.mxu0 %v104
    %128 = vmatprep.subr.bf16.mxu0 0
    %129 = vmatpush1.bf16.msra.mxu0 %v105
    %130 = vmatprep.subr.bf16.mxu0 0
    %131 = vmatpush1.bf16.msra.mxu0 0
    %132 = vmatprep.subr.bf16.mxu0 0
    %133 = vmatpush1.bf16.msra.mxu0 0
    %134 = vmatprep.subr.bf16.mxu0 0
    %135 = vmatpush1.bf16.msra.mxu0 0
    %136 = vmatprep.subr.bf16.mxu0 0
    %137 = vmatpush1.bf16.msra.mxu0 0
    %138 = vmatprep.subr.bf16.mxu0 0
    %139 = vmatpush1.bf16.msra.mxu0 0
    %140 = vmatprep.subr.bf16.mxu0 0
    %141 = vmatpush1.bf16.msra.mxu0 0
    %142 = vmatprep.subr.bf16.mxu0 0
    %143 = vmatpush1.bf16.msra.mxu0 0
    %144 = vmatprep.subr.bf16.mxu0 0
    %145 = vmatpush1.bf16.msra.mxu0 0
    %146 = vmatprep.mubr.bf16.mxu0 0
    %147 = vmatmul.mubr.bf16.gmra.mrb[0].mxu0 %v42
    %v148 = vpop.f32.mrb[0].mxu0
    %v149 = vadd.f32 %v64, %v148
    %v150 = vpop.f32.mrb[0].mxu0
    %v151 = vpop.f32.mrb[0].mxu0
    %v152 = vpop.f32.mrb[0].mxu0
    %153 = vdwg.mxu0
    %v154 = vmax.f32 %v149, 0.0
    %155 = vst [vmem:[#allocation3] sm:$0xff] %v154
    %v156 = vld [vmem:[#allocation3] sm:$0xff]
    %v157 = vpack.c.bf16 %v156, %v156
    %s158 = scalar_lea.vmem [#allocation7], 64
    %v159 = vld [vmem:[%s158] sm:$0xf]
    %v160 = vld [vmem:[%s158 + $0x4] sm:$0xf]
    %v161 = vld [vmem:[%s158 + $0x8] sm:$0xf]
    %v162 = vld [vmem:[%s158 + $0xc] sm:$0xf]
    %v163 = vld [vmem:[%s158 + $0x10] sm:$0xf]
    %v164 = vld [vmem:[%s158 + $0x14] sm:$0xf]
    %v165 = vld [vmem:[%s158 + $0x18] sm:$0xf]
    %v166 = vld [vmem:[%s158 + $0x1c] sm:$0xf]
    %v167 = vld [vmem:[%s158 + $0x20] sm:$0xf]
    %v168 = vld [vmem:[%s158 + $0x24] sm:$0xf]
    %v169 = vld [vmem:[%s158 + $0x28] sm:$0xf]
    %v170 = vld [vmem:[%s158 + $0x2c] sm:$0xf]
    %v171 = vld [vmem:[%s158 + $0x30] sm:$0xf]
    %v172 = vld [vmem:[%s158 + $0x34] sm:$0xf]
    %v173 = vld [vmem:[%s158 + $0x38] sm:$0xf]
    %v174 = vld [vmem:[%s158 + $0x3c] sm:$0xf]
    %s175 = scalar_lea.vmem %s2, 1
    %v176 = vld [vmem:[%s175] sm:$0x1]
    %v178 = vlaneseq
    %v179 = vshrl.u32 %v178, 7
    %v180 = vsub.s32 0, %v179
    %v181 = vrot.slane %v176, %v180
    %v199 = vunpack.c.l.b16 %v159
    %v200 = vunpack.c.l.b16 %v160
    %v201 = vunpack.c.l.b16 %v161
    %v202 = vunpack.c.l.b16 %v162
    %v203 = vunpack.c.l.b16 %v163
    %v204 = vunpack.c.l.b16 %v164
    %v205 = vunpack.c.l.b16 %v165
    %v206 = vunpack.c.l.b16 %v166
    %v207 = vunpack.c.l.b16 %v167
    %v208 = vunpack.c.l.b16 %v168
    %v209 = vunpack.c.l.b16 %v169
    %v210 = vunpack.c.l.b16 %v170
    %v211 = vunpack.c.l.b16 %v171
    %v212 = vunpack.c.l.b16 %v172
    %v213 = vunpack.c.l.b16 %v173
    %v214 = vunpack.c.l.b16 %v174
    %v215 = vpack.c.b16 %v200, %v199
    %v216 = vpack.c.b16 %v202, %v201
    %v217 = vpack.c.b16 %v204, %v203
    %v218 = vpack.c.b16 %v206, %v205
    %v219 = vpack.c.b16 %v208, %v207
    %v220 = vpack.c.b16 %v210, %v209
    %v221 = vpack.c.b16 %v212, %v211
    %v222 = vpack.c.b16 %v214, %v213
    %231 = vmatprep.subr.bf16.mxu0 0
    %232 = vmatpush1.bf16.msra.mxu0 %v215
    %233 = vmatprep.subr.bf16.mxu0 0
    %234 = vmatpush1.bf16.msra.mxu0 %v216
    %235 = vmatprep.subr.bf16.mxu0 0
    %236 = vmatpush1.bf16.msra.mxu0 %v217
    %237 = vmatprep.subr.bf16.mxu0 0
    %238 = vmatpush1.bf16.msra.mxu0 %v218
    %239 = vmatprep.subr.bf16.mxu0 0
    %240 = vmatpush1.bf16.msra.mxu0 %v219
    %241 = vmatprep.subr.bf16.mxu0 0
    %242 = vmatpush1.bf16.msra.mxu0 %v220
    %243 = vmatprep.subr.bf16.mxu0 0
    %244 = vmatpush1.bf16.msra.mxu0 %v221
    %245 = vmatprep.subr.bf16.mxu0 0
    %246 = vmatpush1.bf16.msra.mxu0 %v222
    %247 = vmatprep.subr.bf16.mxu0 0
    %248 = vmatpush1.bf16.msra.mxu0 0
    %249 = vmatprep.subr.bf16.mxu0 0
    %250 = vmatpush1.bf16.msra.mxu0 0
    %251 = vmatprep.subr.bf16.mxu0 0
    %252 = vmatpush1.bf16.msra.mxu0 0
    %253 = vmatprep.subr.bf16.mxu0 0
    %254 = vmatpush1.bf16.msra.mxu0 0
    %255 = vmatprep.subr.bf16.mxu0 0
    %256 = vmatpush1.bf16.msra.mxu0 0
    %257 = vmatprep.subr.bf16.mxu0 0
    %258 = vmatpush1.bf16.msra.mxu0 0
    %259 = vmatprep.subr.bf16.mxu0 0
    %260 = vmatpush1.bf16.msra.mxu0 0
    %261 = vmatprep.subr.bf16.mxu0 0
    %262 = vmatpush1.bf16.msra.mxu0 0
    %263 = vmatprep.mubr.bf16.mxu0 0
    %264 = vmatmul.mubr.bf16.gmra.mrb[0].mxu0 %v157
    %v265 = vpop.f32.mrb[0].mxu0
    %v266 = vadd.f32 %v181, %v265
    %v267 = vpop.f32.mrb[0].mxu0
    %v268 = vpop.f32.mrb[0].mxu0
    %v269 = vpop.f32.mrb[0].mxu0
    %270 = vdwg.mxu0
    %v271 = vmax.f32 %v266, 0.0
    %272 = vst [vmem:[#allocation2] sm:$0xff] %v271
    %v273 = vld [vmem:[#allocation2] sm:$0xff]
    %v274 = vpack.c.bf16 %v273, %v273
    %s275 = scalar_lea.vmem [#allocation7], 128
    %v276 = vld [vmem:[%s275] sm:$0xf]
    %v277 = vld [vmem:[%s275 + $0x4] sm:$0xf]
    %v278 = vld [vmem:[%s275 + $0x8] sm:$0xf]
    %v279 = vld [vmem:[%s275 + $0xc] sm:$0xf]
    %v280 = vld [vmem:[%s275 + $0x10] sm:$0xf]
    %v281 = vld [vmem:[%s275 + $0x14] sm:$0xf]
    %v282 = vld [vmem:[%s275 + $0x18] sm:$0xf]
    %v283 = vld [vmem:[%s275 + $0x1c] sm:$0xf]
    %v284 = vld [vmem:[%s275 + $0x20] sm:$0xf]
    %v285 = vld [vmem:[%s275 + $0x24] sm:$0xf]
    %v286 = vld [vmem:[%s275 + $0x28] sm:$0xf]
    %v287 = vld [vmem:[%s275 + $0x2c] sm:$0xf]
    %v288 = vld [vmem:[%s275 + $0x30] sm:$0xf]
    %v289 = vld [vmem:[%s275 + $0x34] sm:$0xf]
    %v290 = vld [vmem:[%s275 + $0x38] sm:$0xf]
    %v291 = vld [vmem:[%s275 + $0x3c] sm:$0xf]
    %s292 = scalar_lea.vmem %s2, 2
    %v293 = vld [vmem:[%s292] sm:$0x1]
    %v295 = vlaneseq
    %v296 = vshrl.u32 %v295, 7
    %v297 = vsub.s32 0, %v296
    %v298 = vrot.slane %v293, %v297
    %v316 = vunpack.c.l.b16 %v276
    %v317 = vunpack.c.l.b16 %v277
    %v318 = vunpack.c.l.b16 %v278
    %v319 = vunpack.c.l.b16 %v279
    %v320 = vunpack.c.l.b16 %v280
    %v321 = vunpack.c.l.b16 %v281
    %v322 = vunpack.c.l.b16 %v282
    %v323 = vunpack.c.l.b16 %v283
    %v324 = vunpack.c.l.b16 %v284
    %v325 = vunpack.c.l.b16 %v285
    %v326 = vunpack.c.l.b16 %v286
    %v327 = vunpack.c.l.b16 %v287
    %v328 = vunpack.c.l.b16 %v288
    %v329 = vunpack.c.l.b16 %v289
    %v330 = vunpack.c.l.b16 %v290
    %v331 = vunpack.c.l.b16 %v291
    %v332 = vpack.c.b16 %v317, %v316
    %v333 = vpack.c.b16 %v319, %v318
    %v334 = vpack.c.b16 %v321, %v320
    %v335 = vpack.c.b16 %v323, %v322
    %v336 = vpack.c.b16 %v325, %v324
    %v337 = vpack.c.b16 %v327, %v326
    %v338 = vpack.c.b16 %v329, %v328
    %v339 = vpack.c.b16 %v331, %v330
    %348 = vmatprep.subr.bf16.mxu0 0
    %349 = vmatpush1.bf16.msra.mxu0 %v332
    %350 = vmatprep.subr.bf16.mxu0 0
    %351 = vmatpush1.bf16.msra.mxu0 %v333
    %352 = vmatprep.subr.bf16.mxu0 0
    %353 = vmatpush1.bf16.msra.mxu0 %v334
    %354 = vmatprep.subr.bf16.mxu0 0
    %355 = vmatpush1.bf16.msra.mxu0 %v335
    %356 = vmatprep.subr.bf16.mxu0 0
    %357 = vmatpush1.bf16.msra.mxu0 %v336
    %358 = vmatprep.subr.bf16.mxu0 0
    %359 = vmatpush1.bf16.msra.mxu0 %v337
    %360 = vmatprep.subr.bf16.mxu0 0
    %361 = vmatpush1.bf16.msra.mxu0 %v338
    %362 = vmatprep.subr.bf16.mxu0 0
    %363 = vmatpush1.bf16.msra.mxu0 %v339
    %364 = vmatprep.subr.bf16.mxu0 0
    %365 = vmatpush1.bf16.msra.mxu0 0
    %366 = vmatprep.subr.bf16.mxu0 0
    %367 = vmatpush1.bf16.msra.mxu0 0
    %368 = vmatprep.subr.bf16.mxu0 0
    %369 = vmatpush1.bf16.msra.mxu0 0
    %370 = vmatprep.subr.bf16.mxu0 0
    %371 = vmatpush1.bf16.msra.mxu0 0
    %372 = vmatprep.subr.bf16.mxu0 0
    %373 = vmatpush1.bf16.msra.mxu0 0
    %374 = vmatprep.subr.bf16.mxu0 0
    %375 = vmatpush1.bf16.msra.mxu0 0
    %376 = vmatprep.subr.bf16.mxu0 0
    %377 = vmatpush1.bf16.msra.mxu0 0
    %378 = vmatprep.subr.bf16.mxu0 0
    %379 = vmatpush1.bf16.msra.mxu0 0
    %380 = vmatprep.mubr.bf16.mxu0 0
    %381 = vmatmul.mubr.bf16.gmra.mrb[0].mxu0 %v274
    %v382 = vpop.f32.mrb[0].mxu0
    %v383 = vadd.f32 %v298, %v382
    %v384 = vpop.f32.mrb[0].mxu0
    %v385 = vpop.f32.mrb[0].mxu0
    %v386 = vpop.f32.mrb[0].mxu0
    %387 = vdwg.mxu0
    %388 = vst [vmem:[#allocation9] sm:$0xff] %v383
    // Predicated region
    $region22: #{tpu_custom_call.1} parent=1 // pred_check
      _
    $region23: #{tpu_custom_call.1} parent=1 // pred_check_branch
      %390 = sbr.rel (0) target = $region25
    $region24: #{tpu_custom_call.1} parent=1 // pred_region
      %s392 = ssub.s32 128, 128
      %393 = vsyncadd [#allocation6], %s392
      %s395 = sshll.u32 [#allocation9], 4
      %s396 = int_to_ptr.vmem [resolvable:$true] %s395
      %398 = dma.vmem_to_hbm [thread:$0]  %s396, 128, %s3, [#allocation6]
    $region25: #{tpu_custom_call.1} parent=1 // pred_fallthru
      _
    // Predicated region
    $region26: #{tpu_custom_call.1} parent=1 // pred_check
      _
    $region27: #{tpu_custom_call.1} parent=1 // pred_check_branch
      %400 = sbr.rel (0) target = $region29
    $region28: #{tpu_custom_call.1} parent=1 // pred_region
      %401 = dma.done [#allocation6], 128
    $region29: #{tpu_custom_call.1} parent=1 // pred_fallthru
      _
    %402 = vsyncpa [#allocation5], 1
    %403 = vsyncpa [#allocation8], 1
    %404 = vsyncpa [#allocation6], 1

</llo_original>
